<compile_context>
chip_gen: v6e
topology: v6e:2x2x1
jax: 0.10.0
libtpu: 0.0.40
codegen_flags: <defaults>
</compile_context>

<pallas_src>
import math

import jax
import jax.numpy as jnp
import numpy as np
from jax.experimental import pallas as pl
from jax.experimental.pallas import tpu as pltpu


_TARGET_BLOCK_BYTES = 2 * 1024 * 1024  # aim for ~2 MiB per VMEM block buffer


# --------------------------------------------------------------------------- #
# Small static helpers (all trace-time Python)
# --------------------------------------------------------------------------- #
def _divisors(n):
    out = set()
    i = 1
    while i * i <= n:
        if n % i == 0:
            out.add(i)
            out.add(n // i)
        i += 1
    return out


def _largest_divisor_leq(n, cap, multiple_of=1):
    cap = max(1, min(n, cap))
    best = None
    for d in _divisors(n):
        if d <= cap and d % multiple_of == 0 and (best is None or d > best):
            best = d
    return best


def _pick_hw_tile(hw, cap_elems):
    """Largest tile of the flattened spatial dim: multiple of 128, divides hw."""
    if hw <= cap_elems:
        return hw
    d = _largest_divisor_leq(hw, cap_elems, multiple_of=128)
    if d is None:
        d = _largest_divisor_leq(hw, cap_elems)
        if d is None or d < 128:
            d = hw  # no useful divisor: keep whole extent (still lane-dense)
    return d


def _round_up(x, m):
    return ((x + m - 1) // m) * m


def _vmem_block_bytes(block_shape, dtype):
    """Upper bound on one block's VMEM footprint (lane / sublane padding)."""
    shape = list(block_shape)
    if len(shape) >= 1:
        shape[-1] = _round_up(shape[-1], 128)
    if len(shape) >= 2:
        shape[-2] = _round_up(shape[-2], 8)
    return int(np.prod(shape)) * np.dtype(dtype).itemsize


def _vmem_limit(block_bytes_per_step):
    # Double-buffered blocks + compiler headroom, capped well under v7x's 64 MiB.
    return int(min(48 * 2 ** 20, max(4 * 2 ** 20, 2 * block_bytes_per_step + 2 * 2 ** 20)))


# --------------------------------------------------------------------------- #
# Path 1: all inputs already share the output's spatial size -> pure concat.
# Grid (B, HW // hw_tile), lane-dense flattened blocks, all axes parallel.
# --------------------------------------------------------------------------- #
def _concat_same_spatial(tensors, *, out_dtype):
    B, _, H, W = tensors[0].shape
    HW = H * W
    channels = [int(t.shape[1]) for t in tensors]
    offsets = [0]
    for c in channels[:-1]:
        offsets.append(offsets[-1] + c)
    Ctot = sum(channels)

    itemsize = max([np.dtype(t.dtype).itemsize for t in tensors]
                   + [np.dtype(out_dtype).itemsize])
    cap = max(128, _TARGET_BLOCK_BYTES // (itemsize * max(1, Ctot)))
    hw_t = _pick_hw_tile(HW, cap)
    grid = (B, HW // hw_t)

    flat = [t.reshape(B, c, HW) for t, c in zip(tensors, channels)]
    in_specs = [pl.BlockSpec((1, c, hw_t), lambda b, s: (b, 0, s)) for c in channels]
    out_spec = pl.BlockSpec((1, Ctot, hw_t), lambda b, s: (b, 0, s))

    def kernel(*refs):
        o_ref = refs[-1]
        for ref, c0, c in zip(refs[:-1], offsets, channels):
            # NOTE: if c0 is not a multiple of 8 this store is sublane-masked;
            # typical U-Net channel counts are multiples of 8 so it stays dense.
            o_ref[0, c0:c0 + c, :] = ref[0].astype(out_dtype)

    block_bytes = sum(_vmem_block_bytes((1, c, hw_t), t.dtype)
                      for c, t in zip(channels, tensors))
    block_bytes += _vmem_block_bytes((1, Ctot, hw_t), out_dtype)

    total_bytes = sum(int(t.size) * np.dtype(t.dtype).itemsize for t in tensors)
    total_bytes += B * Ctot * HW * np.dtype(out_dtype).itemsize

    out_flat = pl.pallas_call(
        kernel,
        out_shape=jax.ShapeDtypeStruct((B, Ctot, HW), out_dtype),
        grid=grid,
        in_specs=in_specs,
        out_specs=out_spec,
        compiler_params=pltpu.CompilerParams(
            dimension_semantics=("parallel", "parallel"),
            vmem_limit_bytes=_vmem_limit(block_bytes),
        ),
        cost_estimate=pl.CostEstimate(flops=0, transcendentals=0,
                                      bytes_accessed=int(total_bytes)),
    )(*flat)
    return out_flat.reshape(B, Ctot, H, W)


# --------------------------------------------------------------------------- #
# Path 2: exactly two inputs and the second needs spatial padding (U-Net skip).
# Grid (B, Ctot // c_tile); each step writes one output channel tile.  Steps
# t < n0 copy a tile of x; steps t >= n0 pad+copy a tile of (already cropped) y.
# --------------------------------------------------------------------------- #
def _concat_pad2(x, y, *, top, left, out_dtype):
    B, cx, H, W = x.shape
    cy, yh, yw = int(y.shape[1]), int(y.shape[2]), int(y.shape[3])
    Ctot = cx + cy
    bot = H - top - yh
    right = W - left - yw
    assert bot >= 0 and right >= 0

    itemsize = max(np.dtype(x.dtype).itemsize, np.dtype(y.dtype).itemsize,
                   np.dtype(out_dtype).itemsize)
    ct_cap = max(1, _TARGET_BLOCK_BYTES // (itemsize * H * W))
    ct = _largest_divisor_leq(math.gcd(cx, cy), ct_cap)  # tile divides both inputs
    n0, n1 = cx // ct, cy // ct
    grid = (B, n0 + n1)

    # When a step does not belong to an input, its block index is pinned to an
    # edge block so Pallas skips re-fetching it (index unchanged between steps).
    in_specs = [
        pl.BlockSpec((1, ct, H, W),
                     lambda b, t: (b, jnp.minimum(t, n0 - 1), 0, 0)),
        pl.BlockSpec((1, ct, yh, yw),
                     lambda b, t: (b, jnp.clip(t - n0, 0, n1 - 1), 0, 0)),
    ]
    out_spec = pl.BlockSpec((1, ct, H, W), lambda b, t: (b, t, 0, 0))

    def kernel(x_ref, y_ref, o_ref):
        t = pl.program_id(1)

        @pl.when(t < n0)            # this output channel tile belongs to x
        def _():
            o_ref[...] = x_ref[...].astype(out_dtype)

        @pl.when(t >= n0)           # this output channel tile belongs to padded y
        def _():
            # At most 4 thin zero-border stores + 1 interior store, all static
            # slices into this block (no per-row loop, interior written once).
            if top > 0:
                o_ref[0, :, 0:top, :] = jnp.zeros((ct, top, W), out_dtype)
            if bot > 0:
                o_ref[0, :, top + yh:H, :] = jnp.zeros((ct, bot, W), out_dtype)
            if left > 0:
                o_ref[0, :, top:top + yh, 0:left] = jnp.zeros((ct, yh, left), out_dtype)
            if right > 0:
                o_ref[0, :, top:top + yh, left + yw:W] = jnp.zeros((ct, yh, right), out_dtype)
            o_ref[0, :, top:top + yh, left:left + yw] = y_ref[0].astype(out_dtype)

    block_bytes = (_vmem_block_bytes((1, ct, H, W), x.dtype)
                   + _vmem_block_bytes((1, ct, yh, yw), y.dtype)
                   + _vmem_block_bytes((1, ct, H, W), out_dtype))

    total_bytes = (int(x.size) * np.dtype(x.dtype).itemsize
                   + int(y.size) * np.dtype(y.dtype).itemsize
                   + B * Ctot * H * W * np.dtype(out_dtype).itemsize)

    out = pl.pallas_call(
        kernel,
        out_shape=jax.ShapeDtypeStruct((B, Ctot, H, W), out_dtype),
        grid=grid,
        in_specs=in_specs,
        out_specs=out_spec,
        compiler_params=pltpu.CompilerParams(
            dimension_semantics=("parallel", "parallel"),
            vmem_limit_bytes=_vmem_limit(block_bytes),
        ),
        cost_estimate=pl.CostEstimate(flops=0, transcendentals=0,
                                      bytes_accessed=int(total_bytes)),
    )(x, y)
    return out


# --------------------------------------------------------------------------- #
# Wrapper: mirrors Concat.forward
# --------------------------------------------------------------------------- #
def concat(tensors, dim=None):
    if dim is None:
        dim = 1
    assert dim == 1, "Concat module concatenates along dim=1 (channels)"
    tensors = [jnp.asarray(t) for t in tensors]
    assert len(tensors) >= 1 and all(t.ndim == 4 for t in tensors)

    x = tensors[0]
    B, _, H, W = x.shape
    out_dtype = jnp.result_type(*[t.dtype for t in tensors])

    pad_needed = (len(tensors) == 2
                  and tuple(tensors[1].shape[2:]) != (H, W))

    if not pad_needed:
        for t in tensors:
            assert t.shape[0] == B and tuple(t.shape[2:]) == (H, W), (
                "without the 2-tensor padding path all spatial sizes must match")
        return _concat_same_spatial(tensors, out_dtype=out_dtype)

    # Two tensors with mismatching spatial size: F.pad the second to the first.
    y = tensors[1]
    assert y.shape[0] == B, "batch sizes must match"
    yh, yw = int(y.shape[2]), int(y.shape[3])
    dY, dX = H - yh, W - yw
    pad_t, pad_b = dY // 2, dY - dY // 2
    pad_l, pad_r = dX // 2, dX - dX // 2

    # Negative pad values crop (exactly like F.pad with negative padding).
    src_t, src_l = max(0, -pad_t), max(0, -pad_l)
    keep_h = yh - src_t - max(0, -pad_b)
    keep_w = yw - src_l - max(0, -pad_r)
    if (src_t, src_l, keep_h, keep_w) != (0, 0, yh, yw):
        y = y[:, :, src_t:src_t + keep_h, src_l:src_l + keep_w]
    top, left = max(0, pad_t), max(0, pad_l)

    return _concat_pad2(x, y, top=top, left=left, out_dtype=out_dtype)


# --------------------------------------------------------------------------- #
# Pure-JAX reference mirroring the PyTorch module
# --------------------------------------------------------------------------- #
def _reference_concat(tensors):
    tensors = list(tensors)
    if len(tensors) == 2:
        x, y = tensors
        dY = x.shape[2] - y.shape[2]
        dX = x.shape[3] - y.shape[3]
        y = jax.lax.pad(
            y, jnp.zeros((), y.dtype),
            [(0, 0, 0), (0, 0, 0),
             (dY // 2, dY - dY // 2, 0),
             (dX // 2, dX - dX // 2, 0)])
        tensors = [x, y]
    dt = jnp.result_type(*[t.dtype for t in tensors])
    return jnp.concatenate([t.astype(dt) for t in tensors], axis=1)


if __name__ == "__main__":
    key = jax.random.PRNGKey(0)
    ks = jax.random.split(key, 6)

    x = jax.random.normal(ks[0], (2, 4, 16, 16), dtype=jnp.float32)

    # 1) classic U-Net skip: pad both H and W of the second tensor.
    y = jax.random.normal(ks[1], (2, 3, 12, 12), dtype=jnp.float32)
    out = jax.block_until_ready(concat((x, y)))
    assert out.shape == (2, 7, 16, 16), out.shape
    assert jnp.array_equal(out, _reference_concat((x, y))), "mismatch (pad H+W path)"

    # 2) diffX == 0 (only rows are padded).
    y2 = jax.random.normal(ks[2], (2, 3, 12, 16), dtype=jnp.float32)
    out2 = jax.block_until_ready(concat((x, y2)))
    assert jnp.array_equal(out2, _reference_concat((x, y2))), "mismatch (pad-H-only path)"

    # 3) two tensors, same spatial size -> plain concat (same-spatial path).
    x3 = jax.random.normal(ks[3], (2, 2, 16, 16), dtype=jnp.float32)
    out3 = jax.block_until_ready(concat((x, x3)))
    assert jnp.array_equal(out3, _reference_concat((x, x3))), "mismatch (copy path)"

    # 4) second tensor larger -> negative pads crop (F.pad with negative values).
    y4 = jax.random.normal(ks[4], (2, 3, 19, 17), dtype=jnp.float32)
    out4 = jax.block_until_ready(concat((x, y4)))
    assert jnp.array_equal(out4, _reference_concat((x, y4))), "mismatch (crop path)"

    # 5) >2 tensors, mixed dtype -> promotion + in-kernel cast, same-spatial path.
    xb = jax.random.normal(ks[5], (2, 5, 16, 16), dtype=jnp.bfloat16)
    out5 = jax.block_until_ready(concat((x, xb, x3)))
    ref5 = jnp.concatenate([x, xb.astype(jnp.float32), x3], axis=1)
    assert out5.dtype == jnp.float32
    assert jnp.array_equal(out5, ref5), "mismatch (mixed-dtype concat)"

    print("KERNEL_OK")
</pallas_src>

<mosaic_0001>
module attributes {stable_mosaic.version = 11 : i64} {
  func.func @kernel(%arg0: i32, %arg1: i32, %arg2: memref<1x1x16x16xf32, #tpu.memory_space<vmem>>, %arg3: memref<1x1x12x12xf32, #tpu.memory_space<vmem>>, %arg4: memref<1x1x16x16xf32, #tpu.memory_space<vmem>>) attributes {dimension_semantics = [#tpu.dimension_semantics<parallel>, #tpu.dimension_semantics<parallel>], iteration_bounds = array<i64: 2, 7>, scalar_prefetch = 0 : i64, scratch_operands = 0 : i64, tpu.core_type = #tpu.core_type<tc>, window_params = [{transform_indices = @transform_0, window_bounds = array<i64: 1, 1, 16, 16>}, {transform_indices = @transform_1, window_bounds = array<i64: 1, 1, 12, 12>}, {transform_indices = @transform_2, window_bounds = array<i64: 1, 1, 16, 16>}]} {
    %c4_i32 = arith.constant 4 : i32
    %0 = arith.cmpi slt, %arg1, %c4_i32 : i32
    %1 = arith.extui %0 : i1 to i32
    %c0_i32 = arith.constant 0 : i32
    %2 = arith.cmpi ne, %1, %c0_i32 : i32
    scf.if %2 {
      %c0 = arith.constant 0 : index
      %c0_2 = arith.constant 0 : index
      %c0_3 = arith.constant 0 : index
      %c0_4 = arith.constant 0 : index
      %6 = vector.load %arg2[%c0, %c0_2, %c0_3, %c0_4] : memref<1x1x16x16xf32, #tpu.memory_space<vmem>>, vector<1x1x16x16xf32>
      %c0_5 = arith.constant 0 : index
      %c0_6 = arith.constant 0 : index
      %c0_7 = arith.constant 0 : index
      %c0_8 = arith.constant 0 : index
      %7 = vector.load %arg4[%c0_5, %c0_6, %c0_7, %c0_8] : memref<1x1x16x16xf32, #tpu.memory_space<vmem>>, vector<1x1x16x16xf32>
      tpu.vector_store %arg4[%c0_5, %c0_6, %c0_7, %c0_8], %6 {strides = array<i32>} : memref<1x1x16x16xf32, #tpu.memory_space<vmem>>, vector<1x1x16x16xf32>,
    } else {
    }
    %c4_i32_0 = arith.constant 4 : i32
    %3 = arith.cmpi sge, %arg1, %c4_i32_0 : i32
    %4 = arith.extui %3 : i1 to i32
    %c0_i32_1 = arith.constant 0 : i32
    %5 = arith.cmpi ne, %4, %c0_i32_1 : i32
    scf.if %5 {
      %cst = arith.constant 0.000000e+00 : f32
      %6 = vector.broadcast %cst : f32 to vector<1x2x16xf32>
      %c0 = arith.constant 0 : index
      %c0_2 = arith.constant 0 : index
      %c0_3 = arith.constant 0 : index
      %c0_4 = arith.constant 0 : index
      %7 = vector.load %arg4[%c0, %c0_2, %c0_3, %c0_4] : memref<1x1x16x16xf32, #tpu.memory_space<vmem>>, vector<1x1x2x16xf32>
      %8 = vector.shape_cast %7 : vector<1x1x2x16xf32> to vector<1x2x16xf32>
      %9 = vector.shape_cast %6 : vector<1x2x16xf32> to vector<1x1x2x16xf32>
      tpu.vector_store %arg4[%c0, %c0_2, %c0_3, %c0_4], %9 {strides = array<i32>} : memref<1x1x16x16xf32, #tpu.memory_space<vmem>>, vector<1x1x2x16xf32>,
      %cst_5 = arith.constant 0.000000e+00 : f32
      %10 = vector.broadcast %cst_5 : f32 to vector<1x2x16xf32>
      %c0_6 = arith.constant 0 : index
      %c0_7 = arith.constant 0 : index
      %c14 = arith.constant 14 : index
      %c0_8 = arith.constant 0 : index
      %11 = vector.load %arg4[%c0_6, %c0_7, %c14, %c0_8] : memref<1x1x16x16xf32, #tpu.memory_space<vmem>>, vector<1x1x2x16xf32>
      %12 = vector.shape_cast %11 : vector<1x1x2x16xf32> to vector<1x2x16xf32>
      %13 = vector.shape_cast %10 : vector<1x2x16xf32> to vector<1x1x2x16xf32>
      tpu.vector_store %arg4[%c0_6, %c0_7, %c14, %c0_8], %13 {strides = array<i32>} : memref<1x1x16x16xf32, #tpu.memory_space<vmem>>, vector<1x1x2x16xf32>,
      %cst_9 = arith.constant 0.000000e+00 : f32
      %14 = vector.broadcast %cst_9 : f32 to vector<1x12x2xf32>
      %c0_10 = arith.constant 0 : index
      %c0_11 = arith.constant 0 : index
      %c2 = arith.constant 2 : index
      %c0_12 = arith.constant 0 : index
      %15 = vector.load %arg4[%c0_10, %c0_11, %c2, %c0_12] : memref<1x1x16x16xf32, #tpu.memory_space<vmem>>, vector<1x1x12x2xf32>
      %16 = vector.shape_cast %15 : vector<1x1x12x2xf32> to vector<1x12x2xf32>
      %17 = vector.shape_cast %14 : vector<1x12x2xf32> to vector<1x1x12x2xf32>
      tpu.vector_store %arg4[%c0_10, %c0_11, %c2, %c0_12], %17 {strides = array<i32>} : memref<1x1x16x16xf32, #tpu.memory_space<vmem>>, vector<1x1x12x2xf32>,
      %cst_13 = arith.constant 0.000000e+00 : f32
      %18 = vector.broadcast %cst_13 : f32 to vector<1x12x2xf32>
      %c0_14 = arith.constant 0 : index
      %c0_15 = arith.constant 0 : index
      %c2_16 = arith.constant 2 : index
      %c14_17 = arith.constant 14 : index
      %19 = vector.load %arg4[%c0_14, %c0_15, %c2_16, %c14_17] : memref<1x1x16x16xf32, #tpu.memory_space<vmem>>, vector<1x1x12x2xf32>
      %20 = vector.shape_cast %19 : vector<1x1x12x2xf32> to vector<1x12x2xf32>
      %21 = vector.shape_cast %18 : vector<1x12x2xf32> to vector<1x1x12x2xf32>
      tpu.vector_store %arg4[%c0_14, %c0_15, %c2_16, %c14_17], %21 {strides = array<i32>} : memref<1x1x16x16xf32, #tpu.memory_space<vmem>>, vector<1x1x12x2xf32>,
      %c0_18 = arith.constant 0 : index
      %c0_19 = arith.constant 0 : index
      %c0_20 = arith.constant 0 : index
      %c0_21 = arith.constant 0 : index
      %22 = vector.load %arg3[%c0_18, %c0_19, %c0_20, %c0_21] : memref<1x1x12x12xf32, #tpu.memory_space<vmem>>, vector<1x1x12x12xf32>
      %23 = vector.shape_cast %22 : vector<1x1x12x12xf32> to vector<1x12x12xf32>
      %c0_22 = arith.constant 0 : index
      %c0_23 = arith.constant 0 : index
      %c2_24 = arith.constant 2 : index
      %c2_25 = arith.constant 2 : index
      %24 = vector.load %arg4[%c0_22, %c0_23, %c2_24, %c2_25] : memref<1x1x16x16xf32, #tpu.memory_space<vmem>>, vector<1x1x12x12xf32>
      %25 = vector.shape_cast %24 : vector<1x1x12x12xf32> to vector<1x12x12xf32>
      %26 = vector.shape_cast %23 : vector<1x12x12xf32> to vector<1x1x12x12xf32>
      tpu.vector_store %arg4[%c0_22, %c0_23, %c2_24, %c2_25], %26 {strides = array<i32>} : memref<1x1x16x16xf32, #tpu.memory_space<vmem>>, vector<1x1x12x12xf32>,
    } else {
    }
    return
  }
  func.func @transform_0(%arg0: i32, %arg1: i32) -> (i32, i32, i32, i32) {
    %c3_i32 = arith.constant 3 : i32
    %0 = arith.minsi %arg1, %c3_i32 : i32
    %c0_i32 = arith.constant 0 : i32
    %c0_i32_0 = arith.constant 0 : i32
    %c0_i32_1 = arith.constant 0 : i32
    return %arg0, %0, %c0_i32, %c0_i32_0 : i32, i32, i32, i32
  }
  func.func @transform_1(%arg0: i32, %arg1: i32) -> (i32, i32, i32, i32) {
    %c4_i32 = arith.constant 4 : i32
    %0 = arith.subi %arg1, %c4_i32 : i32
    %c0_i32 = arith.constant 0 : i32
    %c2_i32 = arith.constant 2 : i32
    %1 = arith.maxsi %c0_i32, %0 : i32
    %2 = arith.minsi %c2_i32, %1 : i32
    %c0_i32_0 = arith.constant 0 : i32
    %c0_i32_1 = arith.constant 0 : i32
    %c0_i32_2 = arith.constant 0 : i32
    return %arg0, %2, %c0_i32_0, %c0_i32_1 : i32, i32, i32, i32
  }
  func.func @transform_2(%arg0: i32, %arg1: i32) -> (i32, i32, i32, i32) {
    %c0_i32 = arith.constant 0 : i32
    %c0_i32_0 = arith.constant 0 : i32
    %c0_i32_1 = arith.constant 0 : i32
    return %arg0, %arg1, %c0_i32, %c0_i32_0 : i32, i32, i32, i32
  }
}

</mosaic_0001>

<llo_original>
// kernel: tpu_custom_call.1
$region0: #{tpu_custom_call.1}
  #allocation0 [shape = 'u32[]', space=smem, size = 0x4, offset = 0x4, fixed_abs, tag = 'smem constant byte address 0x4 - core index']
  #allocation1 [shape = 'u32[144,128]{1,0:T(1,128)}', space=vmem, size = 0x12000, scoped, tag = 'internal scratch']
  %s0 = inlined_call_operand.vmem [shape: f32[2,4,16,16], index: 0, kind: input, shape index: {}]
  %s1 = inlined_call_operand.vmem [shape: f32[2,3,12,12], index: 1, kind: input, shape index: {}]
  %s2 = inlined_call_operand.hbm [shape: f32[2,7,16,16], index: 2, kind: output, shape index: {}]
  %s3 = sld [smem:[#allocation0]]
  $region49: #{tpu_custom_call.1} parent=0
    _
  %s5 = ssub.s32 1, %s3
  %s6 = scalar_select 0, %s5, %s3
  $region1: #{tpu_custom_call.1} parent=0
    #allocation2 [shape = 'u8[16384]{0}', space=vmem, size = 0x4000, scoped, tag = 'output window, operand 0']
    #allocation3 [shape = 's32[2]{0}', space=sflag, size = 0x8, scoped, tag = 'scoped memory for tpu_custom_call.1']
    %7 = vsyncpa [#allocation3], 0
    %s8 = scalar_lea.sflag [#allocation3], 1
    %9 = vsyncpa %s8, 0
    loop: start=0, step=1, limit=16
    $region2: #{tpu_custom_call.1} parent=1 // loop_pre_header
      _
    $region3: #{tpu_custom_call.1} parent=1 // loop_header
      %s11 = sphi 0, %s15
      %p12 = scmp.ge.s32.totalorder %s11, 16
      %s18 = sphi 0, %s30
      %s19 = sphi 0, %s26
      %s20 = sphi 0, %s18
      %s21 = sphi 0, %s19
      %s22 = sphi 0, %s20
      %s23 = sphi 0, %s21
      %s39 = sphi 0, %s41
      %s42 = sphi 0, %s39
      %s43 = sphi 0, %s42
      %s59 = sphi 0, %s43
      %s77 = sphi 0, %s79
      %s80 = sphi 0, %s77
      %s81 = sphi 0, %s80
      %s97 = sphi 0, %s81
      %s105 = sphi 0, %s107
      %s108 = sphi 0, %s105
      %s109 = sphi 0, %s108
      %s125 = sphi 0, %s109
    $region4: #{tpu_custom_call.1} parent=1 // loop_header_branch
      %14 = sbr.rel (%p12) target = $region8
    $region5: #{tpu_custom_call.1} parent=1 // loop_body
      %s16 = ssub.s32 %s11, 1
      %s17 = ssub.s32 %s11, 2
      %s24 = sadd.s32 1, %s19
      %p25 = scmp.ge.s32.totalorder %s24, 7
      %s26 = scalar_select %p25, 0, %s24
      %s27 = sadd.s32 1, %s18
      %s28 = scalar_select %p25, %s27, %s18
      %p29 = scmp.ge.s32.totalorder %s28, 2
      %s30 = scalar_select %p29, 0, %s28
      %p31 = scmp.lt.s32.totalorder %s19, 3
      %s32 = scalar_select %p31, %s19, 3
      %p33 = scmp.lt.s32.totalorder %s26, 3
      %s34 = scalar_select %p33, %s26, 3
      %s35 = ssub.s32 %s18, %s30
      %s36 = ssub.s32 %s32, %s34
      %s37 = sor.u32 %s35, %s36
      %p38 = scmp.eq.s32.totalorder %s37, 0
      %s40 = sadd.s32 %s39, 1
      %s41 = scalar_select %p38, %s39, %s40
      %p44 = pneg %p38
      %p45 = scmp.eq.s32.totalorder %s11, 13
      %p46 = por %p44, %p45
      %p47 = scmp.ne.s32.totalorder %s39, %s42
      %p48 = scmp.eq.s32.totalorder %s11, 0
      %p49 = por %p47, %p48
      %p50 = scmp.ne.s32.totalorder %s39, %s42
      %p51 = scmp.eq.s32.totalorder %s16, 13
      %p52 = por %p50, %p51
      %p53 = scmp.ne.s32.totalorder %s42, %s43
      %p54 = scmp.eq.s32.totalorder %s16, 0
      %p55 = por %p53, %p54
      %p56 = scmp.ne.s32.totalorder %s42, %s43
      %p57 = scmp.eq.s32.totalorder %s17, 13
      %p58 = por %p56, %p57
      %p60 = scmp.ne.s32.totalorder %s43, %s59
      %p61 = scmp.eq.s32.totalorder %s17, 0
      %p62 = por %p60, %p61
      %s63 = ssub.s32 %s19, 4
      %p64 = scmp.gt.s32.totalorder %s63, 0
      %s65 = scalar_select %p64, %s63, 0
      %p66 = scmp.lt.s32.totalorder %s65, 2
      %s67 = scalar_select %p66, %s65, 2
      %s68 = ssub.s32 %s26, 4
      %p69 = scmp.gt.s32.totalorder %s68, 0
      %s70 = scalar_select %p69, %s68, 0
      %p71 = scmp.lt.s32.totalorder %s70, 2
      %s72 = scalar_select %p71, %s70, 2
      %s73 = ssub.s32 %s18, %s30
      %s74 = ssub.s32 %s67, %s72
      %s75 = sor.u32 %s73, %s74
      %p76 = scmp.eq.s32.totalorder %s75, 0
      %s78 = sadd.s32 %s77, 1
      %s79 = scalar_select %p76, %s77, %s78
      %p82 = pneg %p76
      %p83 = scmp.eq.s32.totalorder %s11, 13
      %p84 = por %p82, %p83
      %p85 = scmp.ne.s32.totalorder %s77, %s80
      %p86 = scmp.eq.s32.totalorder %s11, 0
      %p87 = por %p85, %p86
      %p88 = scmp.ne.s32.totalorder %s77, %s80
      %p89 = scmp.eq.s32.totalorder %s16, 13
      %p90 = por %p88, %p89
      %p91 = scmp.ne.s32.totalorder %s80, %s81
      %p92 = scmp.eq.s32.totalorder %s16, 0
      %p93 = por %p91, %p92
      %p94 = scmp.ne.s32.totalorder %s80, %s81
      %p95 = scmp.eq.s32.totalorder %s17, 13
      %p96 = por %p94, %p95
      %p98 = scmp.ne.s32.totalorder %s81, %s97
      %p99 = scmp.eq.s32.totalorder %s17, 0
      %p100 = por %p98, %p99
      %s101 = ssub.s32 %s18, %s30
      %s102 = ssub.s32 %s19, %s26
      %s103 = sor.u32 %s101, %s102
      %p104 = scmp.eq.s32.totalorder %s103, 0
      %s106 = sadd.s32 %s105, 1
      %s107 = scalar_select %p104, %s105, %s106
      %p110 = pneg %p104
      %p111 = scmp.eq.s32.totalorder %s11, 13
      %p112 = por %p110, %p111
      %p113 = scmp.ne.s32.totalorder %s105, %s108
      %p114 = scmp.eq.s32.totalorder %s11, 0
      %p115 = por %p113, %p114
      %p116 = scmp.ne.s32.totalorder %s105, %s108
      %p117 = scmp.eq.s32.totalorder %s16, 13
      %p118 = por %p116, %p117
      %p119 = scmp.ne.s32.totalorder %s108, %s109
      %p120 = scmp.eq.s32.totalorder %s16, 0
      %p121 = por %p119, %p120
      %p122 = scmp.ne.s32.totalorder %s108, %s109
      %p123 = scmp.eq.s32.totalorder %s17, 13
      %p124 = por %p122, %p123
      %p126 = scmp.ne.s32.totalorder %s109, %s125
      %p127 = scmp.eq.s32.totalorder %s17, 0
      %p128 = por %p126, %p127
      %p129 = scmp.le.s32.totalorder 1, %s11
      %p130 = scmp.lt.s32.totalorder %s11, 15
      %p131 = pnand %p129, %p130
      %p132 = pneg %p131
      // Predicated region
      $region9: #{tpu_custom_call.1} parent=5 // pred_check
        _
      $region10: #{tpu_custom_call.1} parent=5 // pred_check_branch
        %134 = sbr.rel (%p131) target = $region12
      $region11: #{tpu_custom_call.1} parent=5 // pred_region
        %s135 = ssub.s32 %s11, 1
      $region12: #{tpu_custom_call.1} parent=5 // pred_fallthru
        _
      %p136 = scmp.lt.s32.totalorder %s11, 14
      // Predicated region
      $region13: #{tpu_custom_call.1} parent=5 // pred_check
        %p137 = pneg %p136
      $region14: #{tpu_custom_call.1} parent=5 // pred_check_branch
        %139 = sbr.rel (%p137) target = $region16
      $region15: #{tpu_custom_call.1} parent=5 // pred_region
        // Predicated region
        $region17: #{tpu_custom_call.1} parent=15 // pred_check
          %p140 = pneg %p49
        $region18: #{tpu_custom_call.1} parent=15 // pred_check_branch
          %142 = sbr.rel (%p140) target = $region20
        $region19: #{tpu_custom_call.1} parent=15 // pred_region
          %p143 = scmp.lt.s32.totalorder %s19, 3
          %s144 = scalar_select %p143, %s19, 3
          %p145 = scmp.lt.s32.totalorder %s18, 1
          %s146 = scalar_select %p145, %s18, 1
          %p147 = scmp.lt.s32.totalorder %s144, 3
          %s148 = scalar_select %p147, %s144, 3
          %s149 = smul.addr %s148, 2
          %s150 = smul.addr %s146, 8
          %s151 = sadd.s32 %s149, %s150
          %s152 = smul.addr %s151, 8
          %s153 = scalar_lea.vmem %s0, %s152
          %p154 = scmp.lt.s32.totalorder %s19, 3
          %s155 = scalar_select %p154, %s19, 3
        $region20: #{tpu_custom_call.1} parent=15 // pred_fallthru
          _
        // Predicated region
        $region21: #{tpu_custom_call.1} parent=15 // pred_check
          %p156 = pneg %p87
        $region22: #{tpu_custom_call.1} parent=15 // pred_check_branch
          %158 = sbr.rel (%p156) target = $region24
        $region23: #{tpu_custom_call.1} parent=15 // pred_region
          %s159 = ssub.s32 %s19, 4
          %p160 = scmp.gt.s32.totalorder %s159, 0
          %s161 = scalar_select %p160, %s159, 0
          %p162 = scmp.lt.s32.totalorder %s161, 2
          %s163 = scalar_select %p162, %s161, 2
          %p164 = scmp.lt.s32.totalorder %s18, 1
          %s165 = scalar_select %p164, %s18, 1
          %p166 = scmp.lt.s32.totalorder %s163, 2
          %s167 = scalar_select %p166, %s163, 2
          %s168 = smul.addr %s167, 2
          %s169 = smul.addr %s165, 6
          %s170 = sadd.s32 %s168, %s169
          %s171 = smul.addr %s170, 8
          %s172 = scalar_lea.vmem %s1, %s171
          %s173 = ssub.s32 %s19, 4
          %p174 = scmp.gt.s32.totalorder %s173, 0
          %s175 = scalar_select %p174, %s173, 0
          %p176 = scmp.lt.s32.totalorder %s175, 2
          %s177 = scalar_select %p176, %s175, 2
        $region24: #{tpu_custom_call.1} parent=15 // pred_fallthru
          _
      $region16: #{tpu_custom_call.1} parent=5 // pred_fallthru
        _
      %p178 = scmp.le.s32.totalorder 1, %s11
      %p179 = scmp.lt.s32.totalorder %s11, 15
      %p180 = pnand %p178, %p179
      %p181 = pneg %p180
      // Predicated region
      $region25: #{tpu_custom_call.1} parent=5 // pred_check
        _
      $region26: #{tpu_custom_call.1} parent=5 // pred_check_branch
        %183 = sbr.rel (%p180) target = $region28
      $region27: #{tpu_custom_call.1} parent=5 // pred_region
        %s184 = ssub.s32 %s11, 1
        %p185 = scmp.lt.s32.totalorder %s21, 3
        %s186 = scalar_select %p185, %s21, 3
        %p187 = scmp.lt.s32.totalorder %s20, 1
        %s188 = scalar_select %p187, %s20, 1
        %p189 = scmp.lt.s32.totalorder %s186, 3
        %s190 = scalar_select %p189, %s186, 3
        %s191 = smul.addr %s190, 2
        %s192 = smul.addr %s188, 8
        %s193 = sadd.s32 %s191, %s192
        %s194 = smul.addr %s193, 8
        %s195 = scalar_lea.vmem %s0, %s194
        %p196 = pneg %p55
        %p197 = pneg %p52
        %s198 = ssub.s32 %s21, 4
        %p199 = scmp.gt.s32.totalorder %s198, 0
        %s200 = scalar_select %p199, %s198, 0
        %p201 = scmp.lt.s32.totalorder %s200, 2
        %s202 = scalar_select %p201, %s200, 2
        %p203 = scmp.lt.s32.totalorder %s20, 1
        %s204 = scalar_select %p203, %s20, 1
        %p205 = scmp.lt.s32.totalorder %s202, 2
        %s206 = scalar_select %p205, %s202, 2
        %s207 = smul.addr %s206, 2
        %s208 = smul.addr %s204, 6
        %s209 = sadd.s32 %s207, %s208
        %s210 = smul.addr %s209, 8
        %s211 = scalar_lea.vmem %s1, %s210
        %p212 = pneg %p93
        %p213 = pneg %p90
        %p214 = pneg %p121
        %p215 = pneg %p118
        %s216 = sand.u32 %s108, 1
        %s217 = scalar_lea.sflag [#allocation3], %s216
        %s218 = sand.u32 %s108, 1
        %s219 = smul.addr %s218, 16
        %s220 = scalar_lea.vmem [#allocation2], %s219
        %p221 = scmp.lt.s32.totalorder %s21, 3
        %s222 = scalar_select %p221, %s21, 3
        %p223 = scmp.lt.s32.totalorder %s20, 1
        %s224 = scalar_select %p223, %s20, 1
        %p225 = scmp.lt.s32.totalorder %s222, 3
        %s226 = scalar_select %p225, %s222, 3
        %s227 = smul.addr %s226, 2
        %s228 = smul.addr %s224, 8
        %s229 = sadd.s32 %s227, %s228
        %s230 = smul.addr %s229, 8
        %s231 = scalar_lea.vmem %s0, %s230
        %p232 = scmp.lt.s32.totalorder %s21, 3
        %s233 = scalar_select %p232, %s21, 3
        %s234 = ssub.s32 %s21, 4
        %p235 = scmp.gt.s32.totalorder %s234, 0
        %s236 = scalar_select %p235, %s234, 0
        %p237 = scmp.lt.s32.totalorder %s236, 2
        %s238 = scalar_select %p237, %s236, 2
        %p239 = scmp.lt.s32.totalorder %s20, 1
        %s240 = scalar_select %p239, %s20, 1
        %p241 = scmp.lt.s32.totalorder %s238, 2
        %s242 = scalar_select %p241, %s238, 2
        %s243 = smul.addr %s242, 2
        %s244 = smul.addr %s240, 6
        %s245 = sadd.s32 %s243, %s244
        %s246 = smul.addr %s245, 8
        %s247 = scalar_lea.vmem %s1, %s246
        %s248 = ssub.s32 %s21, 4
        %p249 = scmp.gt.s32.totalorder %s248, 0
        %s250 = scalar_select %p249, %s248, 0
        %p251 = scmp.lt.s32.totalorder %s250, 2
        %s252 = scalar_select %p251, %s250, 2
        %p253 = scmp.lt.s32.totalorder %s21, 4
        // Predicated region
        $region29: #{tpu_custom_call.1} parent=27 // pred_check
          %p254 = pneg %p253
        $region30: #{tpu_custom_call.1} parent=27 // pred_check_branch
          %256 = sbr.rel (%p254) target = $region32
        $region31: #{tpu_custom_call.1} parent=27 // pred_region
          %v257 = vld [vmem:[%s231] sm:$0xff]
          %v258 = vld [vmem:[%s231 + $0x8] sm:$0xff]
          %vm259 = vcmask 130048
          %260 = vst.msk [vmem:[%s220] sm:$0xff] %vm259, %v257
          %261 = vst.msk [vmem:[%s220 + $0x8] sm:$0xff] %vm259, %v258
        $region32: #{tpu_custom_call.1} parent=27 // pred_fallthru
          _
        %p262 = scmp.ge.s32.totalorder %s21, 4
        // Predicated region
        $region33: #{tpu_custom_call.1} parent=27 // pred_check
          %p263 = pneg %p262
        $region34: #{tpu_custom_call.1} parent=27 // pred_check_branch
          %265 = sbr.rel (%p263) target = $region36
        $region35: #{tpu_custom_call.1} parent=27 // pred_region
          %vm266 = vcmask 123904
          %267 = vst.msk [vmem:[%s220] sm:$0x3] %vm266, 0.0
          %268 = vst.msk [vmem:[%s220 + $0xe] sm:$0x3] %vm266, 0.0
          %vm269 = vcmask 15360
          %270 = vst.msk [vmem:[%s220 + $0x2] sm:$0xff] %vm269, 0.0
          %vm271 = vcmask 11264
          %272 = vst.msk [vmem:[%s220 + $0xa] sm:$0xf] %vm271, 0.0
          %vm273 = vcmask 130160
          %274 = vst.msk [vmem:[%s220 + $0x2] sm:$0xff] %vm273, 0.0
          %vm275 = vcmask 126064
          %276 = vst.msk [vmem:[%s220 + $0xa] sm:$0xf] %vm275, 0.0
          %v277 = vld [vmem:[%s247] sm:$0xff]
          %v278 = vld [vmem:[%s247 + $0x8] sm:$0xf]
          %281 = vrot.lane.b32.xlu0 %v277, 2
          %v282 = vpop.permute.xlu0 %281
          %283 = vrot.lane.b32.xlu0 %v278, 2
          %v284 = vpop.permute.xlu0 %283
          %vm287 = vcmask 113680
          %288 = vst.msk [vmem:[%s220 + $0x2] sm:$0xff] %vm287, %v282
          %vm289 = vcmask 109584
          %290 = vst.msk [vmem:[%s220 + $0xa] sm:$0xf] %vm289, %v284
        $region36: #{tpu_custom_call.1} parent=27 // pred_fallthru
          _
        %s291 = sand.u32 %s108, 1
        %s292 = scalar_lea.sflag [#allocation3], %s291
        %s293 = sand.u32 %s108, 1
        %s294 = smul.addr %s293, 16
        %s295 = scalar_lea.vmem [#allocation2], %s294
        // Predicated region
        $region37: #{tpu_custom_call.1} parent=27 // pred_check
          %p296 = pneg %p118
        $region38: #{tpu_custom_call.1} parent=27 // pred_check_branch
          %298 = sbr.rel (%p296) target = $region40
        $region39: #{tpu_custom_call.1} parent=27 // pred_region
          %s300 = ssub.s32 256, 256
          %301 = vsyncadd %s292, %s300
          %s302 = smul.addr %s21, 2
          %s303 = smul.addr %s20, 14
          %s304 = sadd.s32 %s302, %s303
          %s305 = smul.addr %s304, 128
          %s306 = scalar_lea.hbm %s2, %s305
          %s307 = sshll.u32 %s295, 4
          %s308 = int_to_ptr.vmem [resolvable:$true] %s307
          %313 = dma.vmem_to_hbm [thread:$0]  %s308, 256, %s306, %s292, 128, 128, 8
        $region40: #{tpu_custom_call.1} parent=27 // pred_fallthru
          _
      $region28: #{tpu_custom_call.1} parent=5 // pred_fallthru
        _
      %p314 = scmp.le.s32.totalorder 2, %s11
      // Predicated region
      $region41: #{tpu_custom_call.1} parent=5 // pred_check
        %p315 = pneg %p314
      $region42: #{tpu_custom_call.1} parent=5 // pred_check_branch
        %317 = sbr.rel (%p315) target = $region44
      $region43: #{tpu_custom_call.1} parent=5 // pred_region
        %s318 = ssub.s32 %s11, 2
        // Predicated region
        $region45: #{tpu_custom_call.1} parent=43 // pred_check
          %p319 = pneg %p124
        $region46: #{tpu_custom_call.1} parent=43 // pred_check_branch
          %321 = sbr.rel (%p319) target = $region48
        $region47: #{tpu_custom_call.1} parent=43 // pred_region
          %s322 = sand.u32 %s109, 1
          %s323 = scalar_lea.sflag [#allocation3], %s322
          %s324 = sand.u32 %s109, 1
          %s325 = smul.addr %s324, 16
          %s326 = scalar_lea.vmem [#allocation2], %s325
          %327 = dma.done %s323, 256
        $region48: #{tpu_custom_call.1} parent=43 // pred_fallthru
          _
      $region44: #{tpu_custom_call.1} parent=5 // pred_fallthru
        _
    $region6: #{tpu_custom_call.1} parent=1 // loop_footer
      %s15 = sadd.s32 1, %s11
    $region7: #{tpu_custom_call.1} parent=1 // loop_footer_branch
      %10 = sbr.rel target = $region3
    $region8: #{tpu_custom_call.1} parent=1 // loop_exit
      _
    %328 = vsyncpa [#allocation3], 1
    %s329 = scalar_lea.sflag [#allocation3], 1
    %330 = vsyncpa %s329, 1

</llo_original>
